<compile_context>
chip_gen: v7x
topology: tpu7x:2x2x1
jax: 0.10.0
libtpu: 0.0.40
codegen_flags: <defaults>
</compile_context>

<pallas_src>
import functools

import jax
import jax.numpy as jnp
from jax.experimental import pallas as pl
from jax.experimental.pallas import tpu as pltpu

INNER = 32   # hidden width inside each NonLinearModel


def _round_up(x, m):
    return ((x + m - 1) // m) * m


def _compose_model_kernel(x_ref,
                          w1_ref, b1_ref,   # encoder.l1: (inputs, 32), (1, 32)
                          w2_ref, b2_ref,   # encoder.l2: (32, 16),     (1, 16)
                          w3_ref, b3_ref,   # output.l1:  (16, 32),     (1, 32)
                          w4_ref, b4_ref,   # output.l2:  (32, outputs),(1, outputs)
                          o_ref):
    x = x_ref[...].astype(jnp.float32)

    # ---- encoder: Linear -> ReLU -> Linear -> L2Norm(dim=1) ----
    h = jnp.dot(x, w1_ref[...], preferred_element_type=jnp.float32) + b1_ref[...]
    h = jnp.maximum(h, 0.0)
    e = jnp.dot(h, w2_ref[...], preferred_element_type=jnp.float32) + b2_ref[...]
    e = e * jax.lax.rsqrt(jnp.sum(e * e, axis=-1, keepdims=True))

    # ---- output head: Linear -> ReLU -> Linear -> L2Norm(dim=1) ----
    g = jnp.dot(e, w3_ref[...], preferred_element_type=jnp.float32) + b3_ref[...]
    g = jnp.maximum(g, 0.0)
    y = jnp.dot(g, w4_ref[...], preferred_element_type=jnp.float32) + b4_ref[...]
    o_ref[...] = (y * jax.lax.rsqrt(jnp.sum(y * y, axis=-1, keepdims=True))).astype(o_ref.dtype)


@functools.partial(jax.jit, static_argnames=("tb",))
def compose_model_forward(x, params, *, tb=4096):
    """x: (B, inputs) float32.  params: dict of weights/biases (see init_params)."""
    B, inputs = x.shape
    hiddens = params["w2"].shape[1]
    outputs = params["w4"].shape[1]

    # --- batch tiling: no host-side padding; Pallas clips the partial edge block ---
    if B <= tb:
        TB = _round_up(B, 8)
    else:
        TB = tb  # for v7x megacore parity, pick tb so cdiv(B, tb) is even when B is large
    grid = (pl.cdiv(B, TB),)

    in_specs = [
        pl.BlockSpec((TB, inputs), lambda i: (i, 0)),        # x (batch-tiled)
        pl.BlockSpec((inputs, INNER), lambda i: (0, 0)),     # w1  (resident across steps)
        pl.BlockSpec((1, INNER), lambda i: (0, 0)),          # b1
        pl.BlockSpec((INNER, hiddens), lambda i: (0, 0)),    # w2
        pl.BlockSpec((1, hiddens), lambda i: (0, 0)),        # b2
        pl.BlockSpec((hiddens, INNER), lambda i: (0, 0)),    # w3
        pl.BlockSpec((1, INNER), lambda i: (0, 0)),          # b3
        pl.BlockSpec((INNER, outputs), lambda i: (0, 0)),    # w4
        pl.BlockSpec((1, outputs), lambda i: (0, 0)),        # b4
    ]
    # Narrow, full-last-dim output block: no 128-lane zero padding written to HBM.
    out_spec = pl.BlockSpec((TB, outputs), lambda i: (i, 0))

    n_rows = grid[0] * TB
    weight_bytes = 4 * (inputs * INNER + INNER
                        + INNER * hiddens + hiddens
                        + hiddens * INNER + INNER
                        + INNER * outputs + outputs)
    cost = pl.CostEstimate(
        flops=2 * B * (inputs * INNER + INNER * hiddens + hiddens * INNER + INNER * outputs),
        transcendentals=2 * B,
        bytes_accessed=n_rows * (inputs + outputs) * 4 + weight_bytes,
    )

    out = pl.pallas_call(
        _compose_model_kernel,
        out_shape=jax.ShapeDtypeStruct((B, outputs), jnp.float32),
        grid=grid,
        in_specs=in_specs,
        out_specs=out_spec,
        compiler_params=pltpu.CompilerParams(
            dimension_semantics=("parallel",)),
        cost_estimate=cost,
    )(x, params["w1"], params["b1"], params["w2"], params["b2"],
      params["w3"], params["b3"], params["w4"], params["b4"])

    return out


def init_params(key, inputs, outputs, hiddens=16, inner=INNER):
    """Deterministic synthetic init.  Weight layout is (in_features, out_features)."""
    ks = jax.random.split(key, 8)

    def uniform_init(k, fan_in, shape):
        # mimic PyTorch nn.Linear default: U(-1/sqrt(fan_in), 1/sqrt(fan_in))
        bound = 1.0 / jnp.sqrt(jnp.float32(fan_in))
        return jax.random.uniform(k, shape, jnp.float32, -bound, bound)

    return {
        # encoder.l1: Linear(inputs, 32)
        "w1": uniform_init(ks[0], inputs, (inputs, inner)),
        "b1": uniform_init(ks[1], inputs, (1, inner)),
        # encoder.l2: Linear(32, hiddens=16)
        "w2": uniform_init(ks[2], inner, (inner, hiddens)),
        "b2": uniform_init(ks[3], inner, (1, hiddens)),
        # output.l1: Linear(hiddens=16, 32)
        "w3": uniform_init(ks[4], hiddens, (hiddens, inner)),
        "b3": uniform_init(ks[5], hiddens, (1, inner)),
        # output.l2: Linear(32, outputs)
        "w4": uniform_init(ks[6], inner, (inner, outputs)),
        "b4": uniform_init(ks[7], inner, (1, outputs)),
    }


def reference_forward(x, p):
    """Pure-JAX reference with identical semantics (for correctness check)."""
    h = jnp.maximum(x @ p["w1"] + p["b1"], 0.0)
    e = h @ p["w2"] + p["b2"]
    e = e / jnp.linalg.norm(e, axis=1, keepdims=True)
    g = jnp.maximum(e @ p["w3"] + p["b3"], 0.0)
    y = g @ p["w4"] + p["b4"]
    return y / jnp.linalg.norm(y, axis=1, keepdims=True)


if __name__ == "__main__":
    key = jax.random.PRNGKey(0)
    k_x, k_p, k_x2 = jax.random.split(key, 3)

    B, INPUTS, OUTPUTS, HIDDENS = 8, 16, 8, 16
    params = init_params(k_p, INPUTS, OUTPUTS, hiddens=HIDDENS)

    # ---- small demo batch (single grid step) ----
    x = jax.random.normal(k_x, (B, INPUTS), dtype=jnp.float32)
    out = jax.block_until_ready(compose_model_forward(x, params))
    ref = jax.block_until_ready(reference_forward(x, params))
    assert out.shape == (B, OUTPUTS)
    assert jnp.allclose(out, ref, atol=1e-5, rtol=1e-5), "mismatch vs reference (small batch)"

    # ---- larger, non-multiple batch exercising the pipelined batch grid + edge clipping ----
    B2 = 777
    x2 = jax.random.normal(k_x2, (B2, INPUTS), dtype=jnp.float32)
    out2 = jax.block_until_ready(compose_model_forward(x2, params, tb=256))
    ref2 = jax.block_until_ready(reference_forward(x2, params))
    assert out2.shape == (B2, OUTPUTS)
    assert jnp.allclose(out2, ref2, atol=1e-5, rtol=1e-5), "mismatch vs reference (tiled batch)"

    print("KERNEL_OK")
</pallas_src>

<mosaic_0001>
module attributes {stable_mosaic.version = 11 : i64} {
  func.func @_compose_model_kernel(%arg0: i32, %arg1: memref<8x16xf32, #tpu.memory_space<vmem>>, %arg2: memref<16x32xf32, #tpu.memory_space<vmem>>, %arg3: memref<1x32xf32, #tpu.memory_space<vmem>>, %arg4: memref<32x16xf32, #tpu.memory_space<vmem>>, %arg5: memref<1x16xf32, #tpu.memory_space<vmem>>, %arg6: memref<16x32xf32, #tpu.memory_space<vmem>>, %arg7: memref<1x32xf32, #tpu.memory_space<vmem>>, %arg8: memref<32x8xf32, #tpu.memory_space<vmem>>, %arg9: memref<1x8xf32, #tpu.memory_space<vmem>>, %arg10: memref<8x8xf32, #tpu.memory_space<vmem>>) attributes {dimension_semantics = [#tpu.dimension_semantics<parallel>], iteration_bounds = array<i64: 1>, scalar_prefetch = 0 : i64, scratch_operands = 0 : i64, tpu.core_type = #tpu.core_type<tc>, window_params = [{transform_indices = @transform_0, window_bounds = array<i64: 8, 16>}, {pipeline_mode = #tpu.pipeline_mode<synchronous>, transform_indices = @transform_1, window_bounds = array<i64: 16, 32>}, {pipeline_mode = #tpu.pipeline_mode<synchronous>, transform_indices = @transform_2, window_bounds = array<i64: 1, 32>}, {pipeline_mode = #tpu.pipeline_mode<synchronous>, transform_indices = @transform_3, window_bounds = array<i64: 32, 16>}, {pipeline_mode = #tpu.pipeline_mode<synchronous>, transform_indices = @transform_4, window_bounds = array<i64: 1, 16>}, {pipeline_mode = #tpu.pipeline_mode<synchronous>, transform_indices = @transform_5, window_bounds = array<i64: 16, 32>}, {pipeline_mode = #tpu.pipeline_mode<synchronous>, transform_indices = @transform_6, window_bounds = array<i64: 1, 32>}, {pipeline_mode = #tpu.pipeline_mode<synchronous>, transform_indices = @transform_7, window_bounds = array<i64: 32, 8>}, {pipeline_mode = #tpu.pipeline_mode<synchronous>, transform_indices = @transform_8, window_bounds = array<i64: 1, 8>}, {transform_indices = @transform_9, window_bounds = array<i64: 8, 8>}]} {
    %c0 = arith.constant 0 : index
    %c0_0 = arith.constant 0 : index
    %0 = vector.load %arg1[%c0, %c0_0] : memref<8x16xf32, #tpu.memory_space<vmem>>, vector<8x16xf32>
    %c0_1 = arith.constant 0 : index
    %c0_2 = arith.constant 0 : index
    %1 = vector.load %arg2[%c0_1, %c0_2] : memref<16x32xf32, #tpu.memory_space<vmem>>, vector<16x32xf32>
    %cst = arith.constant dense<0.000000e+00> : vector<8x32xf32>
    %2 = tpu.matmul %0, %1, %cst {dimension_numbers = #tpu.dot_dimension_numbers<[1], [0], [0], [1], [0, 0, 1, 1], [], []>} : vector<8x16xf32>, vector<16x32xf32>, vector<8x32xf32> -> vector<8x32xf32>
    %c0_3 = arith.constant 0 : index
    %c0_4 = arith.constant 0 : index
    %3 = vector.load %arg3[%c0_3, %c0_4] : memref<1x32xf32, #tpu.memory_space<vmem>>, vector<1x32xf32>
    %4 = vector.broadcast %3 : vector<1x32xf32> to vector<8x32xf32>
    %5 = arith.addf %2, %4 : vector<8x32xf32>
    %cst_5 = arith.constant 0.000000e+00 : f32
    %6 = vector.broadcast %cst_5 : f32 to vector<8x32xf32>
    %7 = arith.maximumf %5, %6 : vector<8x32xf32>
    %c0_6 = arith.constant 0 : index
    %c0_7 = arith.constant 0 : index
    %8 = vector.load %arg4[%c0_6, %c0_7] : memref<32x16xf32, #tpu.memory_space<vmem>>, vector<32x16xf32>
    %cst_8 = arith.constant dense<0.000000e+00> : vector<8x16xf32>
    %9 = tpu.matmul %7, %8, %cst_8 {dimension_numbers = #tpu.dot_dimension_numbers<[1], [0], [0], [1], [0, 0, 1, 1], [], []>} : vector<8x32xf32>, vector<32x16xf32>, vector<8x16xf32> -> vector<8x16xf32>
    %c0_9 = arith.constant 0 : index
    %c0_10 = arith.constant 0 : index
    %10 = vector.load %arg5[%c0_9, %c0_10] : memref<1x16xf32, #tpu.memory_space<vmem>>, vector<1x16xf32>
    %11 = vector.broadcast %10 : vector<1x16xf32> to vector<8x16xf32>
    %12 = arith.addf %9, %11 : vector<8x16xf32>
    %13 = arith.mulf %12, %12 : vector<8x16xf32>
    %cst_11 = arith.constant dense<0.000000e+00> : vector<8xf32>
    %14 = vector.multi_reduction <add>, %13, %cst_11 [1] : vector<8x16xf32> to vector<8xf32>
    %15 = vector.shape_cast %14 : vector<8xf32> to vector<8x1xf32>
    %16 = math.rsqrt %15 : vector<8x1xf32>
    %17 = vector.broadcast %16 : vector<8x1xf32> to vector<8x16xf32>
    %18 = arith.mulf %12, %17 : vector<8x16xf32>
    %c0_12 = arith.constant 0 : index
    %c0_13 = arith.constant 0 : index
    %19 = vector.load %arg6[%c0_12, %c0_13] : memref<16x32xf32, #tpu.memory_space<vmem>>, vector<16x32xf32>
    %cst_14 = arith.constant dense<0.000000e+00> : vector<8x32xf32>
    %20 = tpu.matmul %18, %19, %cst_14 {dimension_numbers = #tpu.dot_dimension_numbers<[1], [0], [0], [1], [0, 0, 1, 1], [], []>} : vector<8x16xf32>, vector<16x32xf32>, vector<8x32xf32> -> vector<8x32xf32>
    %c0_15 = arith.constant 0 : index
    %c0_16 = arith.constant 0 : index
    %21 = vector.load %arg7[%c0_15, %c0_16] : memref<1x32xf32, #tpu.memory_space<vmem>>, vector<1x32xf32>
    %22 = vector.broadcast %21 : vector<1x32xf32> to vector<8x32xf32>
    %23 = arith.addf %20, %22 : vector<8x32xf32>
    %cst_17 = arith.constant 0.000000e+00 : f32
    %24 = vector.broadcast %cst_17 : f32 to vector<8x32xf32>
    %25 = arith.maximumf %23, %24 : vector<8x32xf32>
    %c0_18 = arith.constant 0 : index
    %c0_19 = arith.constant 0 : index
    %26 = vector.load %arg8[%c0_18, %c0_19] : memref<32x8xf32, #tpu.memory_space<vmem>>, vector<32x8xf32>
    %cst_20 = arith.constant dense<0.000000e+00> : vector<8x8xf32>
    %27 = tpu.matmul %25, %26, %cst_20 {dimension_numbers = #tpu.dot_dimension_numbers<[1], [0], [0], [1], [0, 0, 1, 1], [], []>} : vector<8x32xf32>, vector<32x8xf32>, vector<8x8xf32> -> vector<8x8xf32>
    %c0_21 = arith.constant 0 : index
    %c0_22 = arith.constant 0 : index
    %28 = vector.load %arg9[%c0_21, %c0_22] : memref<1x8xf32, #tpu.memory_space<vmem>>, vector<1x8xf32>
    %29 = vector.broadcast %28 : vector<1x8xf32> to vector<8x8xf32>
    %30 = arith.addf %27, %29 : vector<8x8xf32>
    %31 = arith.mulf %30, %30 : vector<8x8xf32>
    %cst_23 = arith.constant dense<0.000000e+00> : vector<8xf32>
    %32 = vector.multi_reduction <add>, %31, %cst_23 [1] : vector<8x8xf32> to vector<8xf32>
    %33 = vector.shape_cast %32 : vector<8xf32> to vector<8x1xf32>
    %34 = math.rsqrt %33 : vector<8x1xf32>
    %35 = vector.broadcast %34 : vector<8x1xf32> to vector<8x8xf32>
    %36 = arith.mulf %30, %35 : vector<8x8xf32>
    %c0_24 = arith.constant 0 : index
    %c0_25 = arith.constant 0 : index
    %37 = vector.load %arg10[%c0_24, %c0_25] : memref<8x8xf32, #tpu.memory_space<vmem>>, vector<8x8xf32>
    tpu.vector_store %arg10[%c0_24, %c0_25], %36 {strides = array<i32>} : memref<8x8xf32, #tpu.memory_space<vmem>>, vector<8x8xf32>,
    return
  }
  func.func @transform_0(%arg0: i32) -> (i32, i32) {
    %c0_i32 = arith.constant 0 : i32
    %c0_i32_0 = arith.constant 0 : i32
    return %arg0, %c0_i32 : i32, i32
  }
  func.func @transform_1(%arg0: i32) -> (i32, i32) {
    %c0_i32 = arith.constant 0 : i32
    %c0_i32_0 = arith.constant 0 : i32
    %c0_i32_1 = arith.constant 0 : i32
    return %c0_i32, %c0_i32_0 : i32, i32
  }
  func.func @transform_2(%arg0: i32) -> (i32, i32) {
    %c0_i32 = arith.constant 0 : i32
    %c0_i32_0 = arith.constant 0 : i32
    %c0_i32_1 = arith.constant 0 : i32
    return %c0_i32, %c0_i32_0 : i32, i32
  }
  func.func @transform_3(%arg0: i32) -> (i32, i32) {
    %c0_i32 = arith.constant 0 : i32
    %c0_i32_0 = arith.constant 0 : i32
    %c0_i32_1 = arith.constant 0 : i32
    return %c0_i32, %c0_i32_0 : i32, i32
  }
  func.func @transform_4(%arg0: i32) -> (i32, i32) {
    %c0_i32 = arith.constant 0 : i32
    %c0_i32_0 = arith.constant 0 : i32
    %c0_i32_1 = arith.constant 0 : i32
    return %c0_i32, %c0_i32_0 : i32, i32
  }
  func.func @transform_5(%arg0: i32) -> (i32, i32) {
    %c0_i32 = arith.constant 0 : i32
    %c0_i32_0 = arith.constant 0 : i32
    %c0_i32_1 = arith.constant 0 : i32
    return %c0_i32, %c0_i32_0 : i32, i32
  }
  func.func @transform_6(%arg0: i32) -> (i32, i32) {
    %c0_i32 = arith.constant 0 : i32
    %c0_i32_0 = arith.constant 0 : i32
    %c0_i32_1 = arith.constant 0 : i32
    return %c0_i32, %c0_i32_0 : i32, i32
  }
  func.func @transform_7(%arg0: i32) -> (i32, i32) {
    %c0_i32 = arith.constant 0 : i32
    %c0_i32_0 = arith.constant 0 : i32
    %c0_i32_1 = arith.constant 0 : i32
    return %c0_i32, %c0_i32_0 : i32, i32
  }
  func.func @transform_8(%arg0: i32) -> (i32, i32) {
    %c0_i32 = arith.constant 0 : i32
    %c0_i32_0 = arith.constant 0 : i32
    %c0_i32_1 = arith.constant 0 : i32
    return %c0_i32, %c0_i32_0 : i32, i32
  }
  func.func @transform_9(%arg0: i32) -> (i32, i32) {
    %c0_i32 = arith.constant 0 : i32
    %c0_i32_0 = arith.constant 0 : i32
    return %arg0, %c0_i32 : i32, i32
  }
}

</mosaic_0001>

<llo_original>
// kernel: compose_model_forward.1
$region0: #{compose_model_forward.1}
  #allocation0 [shape = 'u32[]', space=smem, size = 0x4, offset = 0x4, fixed_abs, tag = 'smem constant byte address 0x4 - core index']
  #allocation1 [shape = 'u32[144,128]{1,0:T(1,128)}', space=vmem, size = 0x12000, scoped, tag = 'internal scratch']
  %s0 = inlined_call_operand.vmem [shape: f32[8,16], index: 0, kind: input, shape index: {}]
  %s1 = inlined_call_operand.vmem [shape: f32[16,32], index: 1, kind: input, shape index: {}]
  %s2 = inlined_call_operand.vmem [shape: f32[1,32], index: 2, kind: input, shape index: {}]
  %s3 = inlined_call_operand.vmem [shape: f32[32,16], index: 3, kind: input, shape index: {}]
  %s4 = inlined_call_operand.vmem [shape: f32[1,16], index: 4, kind: input, shape index: {}]
  %s5 = inlined_call_operand.vmem [shape: f32[16,32], index: 5, kind: input, shape index: {}]
  %s6 = inlined_call_operand.vmem [shape: f32[1,32], index: 6, kind: input, shape index: {}]
  %s7 = inlined_call_operand.vmem [shape: f32[32,8], index: 7, kind: input, shape index: {}]
  %s8 = inlined_call_operand.vmem [shape: f32[1,8], index: 8, kind: input, shape index: {}]
  %s9 = inlined_call_operand.hbm [shape: f32[8,8], index: 9, kind: output, shape index: {}]
  %s10 = sld [smem:[#allocation0]]
  $region46: #{compose_model_forward.1} parent=0
    _
  %s12 = ssub.s32 1, %s10
  %s13 = scalar_select 0, %s12, %s10
  $region1: #{compose_model_forward.1} parent=0
    #allocation2 [shape = 'u8[4096]{0}', space=vmem, size = 0x1000, scoped, tag = 'output window, operand 0, single buffered']
    #allocation3 [shape = 's32[1]{0}', space=sflag, size = 0x4, scoped, tag = 'scoped memory for compose_model_forward.1']
    %14 = vsyncpa [#allocation3], 0
    // Predicated region
    $region2: #{compose_model_forward.1} parent=1 // pred_check
      _
    $region3: #{compose_model_forward.1} parent=1 // pred_check_branch
      %16 = sbr.rel (0) target = $region5
    $region4: #{compose_model_forward.1} parent=1 // pred_region
      _
    $region5: #{compose_model_forward.1} parent=1 // pred_fallthru
      _
    // Predicated region
    $region6: #{compose_model_forward.1} parent=1 // pred_check
      _
    $region7: #{compose_model_forward.1} parent=1 // pred_check_branch
      %18 = sbr.rel (0) target = $region9
    $region8: #{compose_model_forward.1} parent=1 // pred_region
      _
    $region9: #{compose_model_forward.1} parent=1 // pred_fallthru
      _
    // Predicated region
    $region10: #{compose_model_forward.1} parent=1 // pred_check
      _
    $region11: #{compose_model_forward.1} parent=1 // pred_check_branch
      %20 = sbr.rel (0) target = $region13
    $region12: #{compose_model_forward.1} parent=1 // pred_region
      _
    $region13: #{compose_model_forward.1} parent=1 // pred_fallthru
      _
    // Predicated region
    $region14: #{compose_model_forward.1} parent=1 // pred_check
      _
    $region15: #{compose_model_forward.1} parent=1 // pred_check_branch
      %22 = sbr.rel (0) target = $region17
    $region16: #{compose_model_forward.1} parent=1 // pred_region
      _
    $region17: #{compose_model_forward.1} parent=1 // pred_fallthru
      _
    // Predicated region
    $region18: #{compose_model_forward.1} parent=1 // pred_check
      _
    $region19: #{compose_model_forward.1} parent=1 // pred_check_branch
      %24 = sbr.rel (0) target = $region21
    $region20: #{compose_model_forward.1} parent=1 // pred_region
      _
    $region21: #{compose_model_forward.1} parent=1 // pred_fallthru
      _
    // Predicated region
    $region22: #{compose_model_forward.1} parent=1 // pred_check
      _
    $region23: #{compose_model_forward.1} parent=1 // pred_check_branch
      %26 = sbr.rel (0) target = $region25
    $region24: #{compose_model_forward.1} parent=1 // pred_region
      _
    $region25: #{compose_model_forward.1} parent=1 // pred_fallthru
      _
    // Predicated region
    $region26: #{compose_model_forward.1} parent=1 // pred_check
      _
    $region27: #{compose_model_forward.1} parent=1 // pred_check_branch
      %28 = sbr.rel (0) target = $region29
    $region28: #{compose_model_forward.1} parent=1 // pred_region
      _
    $region29: #{compose_model_forward.1} parent=1 // pred_fallthru
      _
    // Predicated region
    $region30: #{compose_model_forward.1} parent=1 // pred_check
      _
    $region31: #{compose_model_forward.1} parent=1 // pred_check_branch
      %30 = sbr.rel (0) target = $region33
    $region32: #{compose_model_forward.1} parent=1 // pred_region
      _
    $region33: #{compose_model_forward.1} parent=1 // pred_fallthru
      _
    // Predicated region
    $region34: #{compose_model_forward.1} parent=1 // pred_check
      _
    $region35: #{compose_model_forward.1} parent=1 // pred_check_branch
      %32 = sbr.rel (0) target = $region37
    $region36: #{compose_model_forward.1} parent=1 // pred_region
      _
    $region37: #{compose_model_forward.1} parent=1 // pred_fallthru
      _
    %v33 = vld [vmem:[%s0] sm:$0xff]
    %v34 = vld [vmem:[%s1] sm:$0xff]
    %v35 = vld [vmem:[%s1 + $0x8] sm:$0xff]
    %v36 = vld [vmem:[%s2] sm:$0x1]
    %v38 = vlaneseq
    %v39 = vshrl.u32 %v38, 7
    %v40 = vsub.s32 0, %v39
    %v41 = vrot.slane %v36, %v40
    %vm43 = vcmask 130048
    %v45 = vsel %vm43, %v33, 0
    %47 = vmatprep.subr.mxu0 0.0
    %48 = vmatpush1.msra.mxu0 %v34
    %49 = vmatprep.subr.mxu0 0.0
    %50 = vmatpush1.msra.mxu0 %v35
    %51 = vmatprep.subr.mxu0 0.0
    %52 = vmatpush1.msra.mxu0 0.0
    %53 = vmatprep.subr.mxu0 0.0
    %54 = vmatpush1.msra.mxu0 0.0
    %55 = vmatprep.subr.mxu0 0.0
    %56 = vmatpush1.msra.mxu0 0.0
    %57 = vmatprep.subr.mxu0 0.0
    %58 = vmatpush1.msra.mxu0 0.0
    %59 = vmatprep.subr.mxu0 0.0
    %60 = vmatpush1.msra.mxu0 0.0
    %61 = vmatprep.subr.mxu0 0.0
    %62 = vmatpush1.msra.mxu0 0.0
    %63 = vmatprep.subr.mxu0 0.0
    %64 = vmatpush1.msra.mxu0 0.0
    %65 = vmatprep.subr.mxu0 0.0
    %66 = vmatpush1.msra.mxu0 0.0
    %67 = vmatprep.subr.mxu0 0.0
    %68 = vmatpush1.msra.mxu0 0.0
    %69 = vmatprep.subr.mxu0 0.0
    %70 = vmatpush1.msra.mxu0 0.0
    %71 = vmatprep.subr.mxu0 0.0
    %72 = vmatpush1.msra.mxu0 0.0
    %73 = vmatprep.subr.mxu0 0.0
    %74 = vmatpush1.msra.mxu0 0.0
    %75 = vmatprep.subr.mxu0 0.0
    %76 = vmatpush1.msra.mxu0 0.0
    %77 = vmatprep.subr.mxu0 0.0
    %78 = vmatpush1.msra.mxu0 0.0
    %79 = vmatprep.subr.mxu0 0.0
    %80 = vmatpush1.msra.mxu0 0.0
    %81 = vmatprep.subr.mxu0 0.0
    %82 = vmatpush1.msra.mxu0 0.0
    %83 = vmatprep.subr.mxu0 0.0
    %84 = vmatpush1.msra.mxu0 0.0
    %85 = vmatprep.subr.mxu0 0.0
    %86 = vmatpush1.msra.mxu0 0.0
    %87 = vmatprep.subr.mxu0 0.0
    %88 = vmatpush1.msra.mxu0 0.0
    %89 = vmatprep.subr.mxu0 0.0
    %90 = vmatpush1.msra.mxu0 0.0
    %91 = vmatprep.subr.mxu0 0.0
    %92 = vmatpush1.msra.mxu0 0.0
    %93 = vmatprep.subr.mxu0 0.0
    %94 = vmatpush1.msra.mxu0 0.0
    %95 = vmatprep.subr.mxu0 0.0
    %96 = vmatpush1.msra.mxu0 0.0
    %97 = vmatprep.subr.mxu0 0.0
    %98 = vmatpush1.msra.mxu0 0.0
    %99 = vmatprep.subr.mxu0 0.0
    %100 = vmatpush1.msra.mxu0 0.0
    %101 = vmatprep.subr.mxu0 0.0
    %102 = vmatpush1.msra.mxu0 0.0
    %103 = vmatprep.subr.mxu0 0.0
    %104 = vmatpush1.msra.mxu0 0.0
    %105 = vmatprep.subr.mxu0 0.0
    %106 = vmatpush1.msra.mxu0 0.0
    %107 = vmatprep.subr.mxu0 0.0
    %108 = vmatpush1.msra.mxu0 0.0
    %109 = vmatprep.subr.mxu0 0.0
    %110 = vmatpush1.msra.mxu0 0.0
    %111 = vmatprep.mubr.f32.mxu0 0.0
    %112 = vmatmul.mubr.f32.gmra.mrb[0].mxu0 %v45
    %v113 = vpop.f32.mrb[0].mxu0
    %v114 = vadd.f32 %v41, %v113
    %v115 = vpop.f32.mrb[0].mxu0
    %116 = vdwg.mxu0
    %v117 = vmax.f32 %v114, 0.0
    %v118 = vld [vmem:[%s3] sm:$0xff]
    %v119 = vld [vmem:[%s3 + $0x8] sm:$0xff]
    %v120 = vld [vmem:[%s3 + $0x10] sm:$0xff]
    %v121 = vld [vmem:[%s3 + $0x18] sm:$0xff]
    %v122 = vld [vmem:[%s4] sm:$0x1]
    %v124 = vlaneseq
    %v125 = vshrl.u32 %v124, 7
    %v126 = vsub.s32 0, %v125
    %v127 = vrot.slane %v122, %v126
    %vm129 = vcmask 261120
    %v131 = vsel %vm129, %v117, 0
    %133 = vmatprep.subr.mxu0 0.0
    %134 = vmatpush1.msra.mxu0 %v118
    %135 = vmatprep.subr.mxu0 0.0
    %136 = vmatpush1.msra.mxu0 %v119
    %137 = vmatprep.subr.mxu0 0.0
    %138 = vmatpush1.msra.mxu0 %v120
    %139 = vmatprep.subr.mxu0 0.0
    %140 = vmatpush1.msra.mxu0 %v121
    %141 = vmatprep.subr.mxu0 0.0
    %142 = vmatpush1.msra.mxu0 0.0
    %143 = vmatprep.subr.mxu0 0.0
    %144 = vmatpush1.msra.mxu0 0.0
    %145 = vmatprep.subr.mxu0 0.0
    %146 = vmatpush1.msra.mxu0 0.0
    %147 = vmatprep.subr.mxu0 0.0
    %148 = vmatpush1.msra.mxu0 0.0
    %149 = vmatprep.subr.mxu0 0.0
    %150 = vmatpush1.msra.mxu0 0.0
    %151 = vmatprep.subr.mxu0 0.0
    %152 = vmatpush1.msra.mxu0 0.0
    %153 = vmatprep.subr.mxu0 0.0
    %154 = vmatpush1.msra.mxu0 0.0
    %155 = vmatprep.subr.mxu0 0.0
    %156 = vmatpush1.msra.mxu0 0.0
    %157 = vmatprep.subr.mxu0 0.0
    %158 = vmatpush1.msra.mxu0 0.0
    %159 = vmatprep.subr.mxu0 0.0
    %160 = vmatpush1.msra.mxu0 0.0
    %161 = vmatprep.subr.mxu0 0.0
    %162 = vmatpush1.msra.mxu0 0.0
    %163 = vmatprep.subr.mxu0 0.0
    %164 = vmatpush1.msra.mxu0 0.0
    %165 = vmatprep.subr.mxu0 0.0
    %166 = vmatpush1.msra.mxu0 0.0
    %167 = vmatprep.subr.mxu0 0.0
    %168 = vmatpush1.msra.mxu0 0.0
    %169 = vmatprep.subr.mxu0 0.0
    %170 = vmatpush1.msra.mxu0 0.0
    %171 = vmatprep.subr.mxu0 0.0
    %172 = vmatpush1.msra.mxu0 0.0
    %173 = vmatprep.subr.mxu0 0.0
    %174 = vmatpush1.msra.mxu0 0.0
    %175 = vmatprep.subr.mxu0 0.0
    %176 = vmatpush1.msra.mxu0 0.0
    %177 = vmatprep.subr.mxu0 0.0
    %178 = vmatpush1.msra.mxu0 0.0
    %179 = vmatprep.subr.mxu0 0.0
    %180 = vmatpush1.msra.mxu0 0.0
    %181 = vmatprep.subr.mxu0 0.0
    %182 = vmatpush1.msra.mxu0 0.0
    %183 = vmatprep.subr.mxu0 0.0
    %184 = vmatpush1.msra.mxu0 0.0
    %185 = vmatprep.subr.mxu0 0.0
    %186 = vmatpush1.msra.mxu0 0.0
    %187 = vmatprep.subr.mxu0 0.0
    %188 = vmatpush1.msra.mxu0 0.0
    %189 = vmatprep.subr.mxu0 0.0
    %190 = vmatpush1.msra.mxu0 0.0
    %191 = vmatprep.subr.mxu0 0.0
    %192 = vmatpush1.msra.mxu0 0.0
    %193 = vmatprep.subr.mxu0 0.0
    %194 = vmatpush1.msra.mxu0 0.0
    %195 = vmatprep.subr.mxu0 0.0
    %196 = vmatpush1.msra.mxu0 0.0
    %197 = vmatprep.mubr.f32.mxu0 0.0
    %198 = vmatmul.mubr.f32.gmra.mrb[0].mxu0 %v131
    %v199 = vpop.f32.mrb[0].mxu0
    %v200 = vadd.f32 %v127, %v199
    %v201 = vpop.f32.mrb[0].mxu0
    %202 = vdwg.mxu0
    %v203 = vmul.f32 %v200, %v200
    %v204 = vsel %vm43, %v203, 0.0
    %205 = vadd.xlane.f32.xlu0 %v204
    %v206 = vpop.xlane.xlu0 %205
    %v207 = vrsqrt.pop %v206
    %v208 = vmul.f32 %v200, %v207
    %v209 = vld [vmem:[%s5] sm:$0xff]
    %v210 = vld [vmem:[%s5 + $0x8] sm:$0xff]
    %v211 = vld [vmem:[%s6] sm:$0x1]
    %v213 = vlaneseq
    %v214 = vshrl.u32 %v213, 7
    %v215 = vsub.s32 0, %v214
    %v216 = vrot.slane %v211, %v215
    %v219 = vsel %vm43, %v208, 0
    %221 = vmatprep.subr.mxu0 0.0
    %222 = vmatpush1.msra.mxu0 %v209
    %223 = vmatprep.subr.mxu0 0.0
    %224 = vmatpush1.msra.mxu0 %v210
    %225 = vmatprep.subr.mxu0 0.0
    %226 = vmatpush1.msra.mxu0 0.0
    %227 = vmatprep.subr.mxu0 0.0
    %228 = vmatpush1.msra.mxu0 0.0
    %229 = vmatprep.subr.mxu0 0.0
    %230 = vmatpush1.msra.mxu0 0.0
    %231 = vmatprep.subr.mxu0 0.0
    %232 = vmatpush1.msra.mxu0 0.0
    %233 = vmatprep.subr.mxu0 0.0
    %234 = vmatpush1.msra.mxu0 0.0
    %235 = vmatprep.subr.mxu0 0.0
    %236 = vmatpush1.msra.mxu0 0.0
    %237 = vmatprep.subr.mxu0 0.0
    %238 = vmatpush1.msra.mxu0 0.0
    %239 = vmatprep.subr.mxu0 0.0
    %240 = vmatpush1.msra.mxu0 0.0
    %241 = vmatprep.subr.mxu0 0.0
    %242 = vmatpush1.msra.mxu0 0.0
    %243 = vmatprep.subr.mxu0 0.0
    %244 = vmatpush1.msra.mxu0 0.0
    %245 = vmatprep.subr.mxu0 0.0
    %246 = vmatpush1.msra.mxu0 0.0
    %247 = vmatprep.subr.mxu0 0.0
    %248 = vmatpush1.msra.mxu0 0.0
    %249 = vmatprep.subr.mxu0 0.0
    %250 = vmatpush1.msra.mxu0 0.0
    %251 = vmatprep.subr.mxu0 0.0
    %252 = vmatpush1.msra.mxu0 0.0
    %253 = vmatprep.subr.mxu0 0.0
    %254 = vmatpush1.msra.mxu0 0.0
    %255 = vmatprep.subr.mxu0 0.0
    %256 = vmatpush1.msra.mxu0 0.0
    %257 = vmatprep.subr.mxu0 0.0
    %258 = vmatpush1.msra.mxu0 0.0
    %259 = vmatprep.subr.mxu0 0.0
    %260 = vmatpush1.msra.mxu0 0.0
    %261 = vmatprep.subr.mxu0 0.0
    %262 = vmatpush1.msra.mxu0 0.0
    %263 = vmatprep.subr.mxu0 0.0
    %264 = vmatpush1.msra.mxu0 0.0
    %265 = vmatprep.subr.mxu0 0.0
    %266 = vmatpush1.msra.mxu0 0.0
    %267 = vmatprep.subr.mxu0 0.0
    %268 = vmatpush1.msra.mxu0 0.0
    %269 = vmatprep.subr.mxu0 0.0
    %270 = vmatpush1.msra.mxu0 0.0
    %271 = vmatprep.subr.mxu0 0.0
    %272 = vmatpush1.msra.mxu0 0.0
    %273 = vmatprep.subr.mxu0 0.0
    %274 = vmatpush1.msra.mxu0 0.0
    %275 = vmatprep.subr.mxu0 0.0
    %276 = vmatpush1.msra.mxu0 0.0
    %277 = vmatprep.subr.mxu0 0.0
    %278 = vmatpush1.msra.mxu0 0.0
    %279 = vmatprep.subr.mxu0 0.0
    %280 = vmatpush1.msra.mxu0 0.0
    %281 = vmatprep.subr.mxu0 0.0
    %282 = vmatpush1.msra.mxu0 0.0
    %283 = vmatprep.subr.mxu0 0.0
    %284 = vmatpush1.msra.mxu0 0.0
    %285 = vmatprep.mubr.f32.mxu0 0.0
    %286 = vmatmul.mubr.f32.gmra.mrb[0].mxu0 %v219
    %v287 = vpop.f32.mrb[0].mxu0
    %v288 = vadd.f32 %v216, %v287
    %v289 = vpop.f32.mrb[0].mxu0
    %290 = vdwg.mxu0
    %v291 = vmax.f32 %v288, 0.0
    %v292 = vld [vmem:[%s7] sm:$0xff]
    %v293 = vld [vmem:[%s7 + $0x8] sm:$0xff]
    %v294 = vld [vmem:[%s7 + $0x10] sm:$0xff]
    %v295 = vld [vmem:[%s7 + $0x18] sm:$0xff]
    %v296 = vld [vmem:[%s8] sm:$0x1]
    %v298 = vlaneseq
    %v299 = vshrl.u32 %v298, 7
    %v300 = vsub.s32 0, %v299
    %v301 = vrot.slane %v296, %v300
    %v304 = vsel %vm129, %v291, 0
    %306 = vmatprep.subr.mxu0 0.0
    %307 = vmatpush1.msra.mxu0 %v292
    %308 = vmatprep.subr.mxu0 0.0
    %309 = vmatpush1.msra.mxu0 %v293
    %310 = vmatprep.subr.mxu0 0.0
    %311 = vmatpush1.msra.mxu0 %v294
    %312 = vmatprep.subr.mxu0 0.0
    %313 = vmatpush1.msra.mxu0 %v295
    %314 = vmatprep.subr.mxu0 0.0
    %315 = vmatpush1.msra.mxu0 0.0
    %316 = vmatprep.subr.mxu0 0.0
    %317 = vmatpush1.msra.mxu0 0.0
    %318 = vmatprep.subr.mxu0 0.0
    %319 = vmatpush1.msra.mxu0 0.0
    %320 = vmatprep.subr.mxu0 0.0
    %321 = vmatpush1.msra.mxu0 0.0
    %322 = vmatprep.subr.mxu0 0.0
    %323 = vmatpush1.msra.mxu0 0.0
    %324 = vmatprep.subr.mxu0 0.0
    %325 = vmatpush1.msra.mxu0 0.0
    %326 = vmatprep.subr.mxu0 0.0
    %327 = vmatpush1.msra.mxu0 0.0
    %328 = vmatprep.subr.mxu0 0.0
    %329 = vmatpush1.msra.mxu0 0.0
    %330 = vmatprep.subr.mxu0 0.0
    %331 = vmatpush1.msra.mxu0 0.0
    %332 = vmatprep.subr.mxu0 0.0
    %333 = vmatpush1.msra.mxu0 0.0
    %334 = vmatprep.subr.mxu0 0.0
    %335 = vmatpush1.msra.mxu0 0.0
    %336 = vmatprep.subr.mxu0 0.0
    %337 = vmatpush1.msra.mxu0 0.0
    %338 = vmatprep.subr.mxu0 0.0
    %339 = vmatpush1.msra.mxu0 0.0
    %340 = vmatprep.subr.mxu0 0.0
    %341 = vmatpush1.msra.mxu0 0.0
    %342 = vmatprep.subr.mxu0 0.0
    %343 = vmatpush1.msra.mxu0 0.0
    %344 = vmatprep.subr.mxu0 0.0
    %345 = vmatpush1.msra.mxu0 0.0
    %346 = vmatprep.subr.mxu0 0.0
    %347 = vmatpush1.msra.mxu0 0.0
    %348 = vmatprep.subr.mxu0 0.0
    %349 = vmatpush1.msra.mxu0 0.0
    %350 = vmatprep.subr.mxu0 0.0
    %351 = vmatpush1.msra.mxu0 0.0
    %352 = vmatprep.subr.mxu0 0.0
    %353 = vmatpush1.msra.mxu0 0.0
    %354 = vmatprep.subr.mxu0 0.0
    %355 = vmatpush1.msra.mxu0 0.0
    %356 = vmatprep.subr.mxu0 0.0
    %357 = vmatpush1.msra.mxu0 0.0
    %358 = vmatprep.subr.mxu0 0.0
    %359 = vmatpush1.msra.mxu0 0.0
    %360 = vmatprep.subr.mxu0 0.0
    %361 = vmatpush1.msra.mxu0 0.0
    %362 = vmatprep.subr.mxu0 0.0
    %363 = vmatpush1.msra.mxu0 0.0
    %364 = vmatprep.subr.mxu0 0.0
    %365 = vmatpush1.msra.mxu0 0.0
    %366 = vmatprep.subr.mxu0 0.0
    %367 = vmatpush1.msra.mxu0 0.0
    %368 = vmatprep.subr.mxu0 0.0
    %369 = vmatpush1.msra.mxu0 0.0
    %370 = vmatprep.mubr.f32.mxu0 0.0
    %371 = vmatmul.mubr.f32.gmra.mrb[0].mxu0 %v304
    %v372 = vpop.f32.mrb[0].mxu0
    %v373 = vadd.f32 %v301, %v372
    %v374 = vpop.f32.mrb[0].mxu0
    %375 = vdwg.mxu0
    %v376 = vmul.f32 %v373, %v373
    %vm377 = vcmask 64512
    %v378 = vsel %vm377, %v376, 0.0
    %379 = vadd.xlane.f32.xlu0 %v378
    %v380 = vpop.xlane.xlu0 %379
    %v381 = vrsqrt.pop %v380
    %v382 = vmul.f32 %v373, %v381
    %383 = vst.msk [vmem:[#allocation2] sm:$0xff] %vm377, %v382
    // Predicated region
    $region38: #{compose_model_forward.1} parent=1 // pred_check
      _
    $region39: #{compose_model_forward.1} parent=1 // pred_check_branch
      %385 = sbr.rel (0) target = $region41
    $region40: #{compose_model_forward.1} parent=1 // pred_region
      %s387 = ssub.s32 128, 128
      %388 = vsyncadd [#allocation3], %s387
      %s390 = sshll.u32 [#allocation2], 4
      %s391 = int_to_ptr.vmem [resolvable:$true] %s390
      %393 = dma.vmem_to_hbm [thread:$0]  %s391, 128, %s9, [#allocation3]
    $region41: #{compose_model_forward.1} parent=1 // pred_fallthru
      _
    // Predicated region
    $region42: #{compose_model_forward.1} parent=1 // pred_check
      _
    $region43: #{compose_model_forward.1} parent=1 // pred_check_branch
      %395 = sbr.rel (0) target = $region45
    $region44: #{compose_model_forward.1} parent=1 // pred_region
      %396 = dma.done [#allocation3], 128
    $region45: #{compose_model_forward.1} parent=1 // pred_fallthru
      _
    %397 = vsyncpa [#allocation3], 1

</llo_original>
